<compile_context>
chip_gen: v7x
topology: tpu7x:2x2x1
jax: 0.10.0
libtpu: 0.0.40
codegen_flags: <defaults>
</compile_context>

<pallas_src>
import jax
import jax.numpy as jnp
from jax.experimental import pallas as pl
from jax.experimental.pallas import tpu as pltpu

IN_FEATURES = 1024
NUM_CLASSES = 10
N_PAD = 128            # lane-dense padded output width (minimum unmasked-store width)
TILE_M = 2048          # max batch-tile rows (8 MiB f32 feat block)
SPLIT_MIN_ROWS = 512   # split batch into >=2 tiles only once each tile has >= this many rows


def _classifier_kernel(x_ref, w_ref, b_ref, o_ref):
    # ReLU on the VPU, full-tile matmul on the MXU with f32 accumulate, bias add.
    x = jnp.maximum(x_ref[...], 0.0)                                   # F.relu(feat)
    acc = jnp.dot(x, w_ref[...], preferred_element_type=jnp.float32)   # fc2 matmul
    o_ref[...] = acc + b_ref[...]                                      # broadcast (1,128) bias


def prepare_params(weight, bias, dtype=jnp.float32):
    """One-time conversion from PyTorch layout to kernel-ready padded layout.

    weight: (10, 1024) -> (1024, 128) in `dtype`, zero-padded columns 10..127
    bias:   (10,)      -> (1, 128) f32, zero-padded
    """
    w_t = jnp.zeros((IN_FEATURES, N_PAD), dtype).at[:, :NUM_CLASSES].set(
        weight.T.astype(dtype))
    b_p = jnp.zeros((1, N_PAD), jnp.float32).at[:, :NUM_CLASSES].set(
        bias.astype(jnp.float32))
    return w_t, b_p


def _round_up(x, m):
    return ((x + m - 1) // m) * m


def _pick_tile(b8, tile_m):
    # Ensure >= 2 tiles once there is enough work to split (v7x: one per TC).
    if b8 >= 2 * SPLIT_MIN_ROWS:
        tm = min(tile_m, _round_up(pl.cdiv(b8, 2), 8))
    else:
        tm = min(tile_m, b8)
    return max(8, tm)


def lenet_classifier_forward(feat, w_padded, b_padded, *,
                             tile_m=TILE_M, tiny_batch_fallback=0):
    """feat: (B, 1024); w_padded: (1024, 128); b_padded: (1, 128).

    Returns (B, 10) f32 logits, matching the PyTorch module.
    """
    B = feat.shape[0]

    # Optional plain-XLA path for tiny batches where launch overhead dominates.
    if B <= tiny_batch_fallback:
        w = w_padded[:, :NUM_CLASSES].astype(jnp.float32)
        b = b_padded[0, :NUM_CLASSES]
        return jnp.maximum(feat, 0.0).astype(jnp.float32) @ w + b

    if feat.dtype != w_padded.dtype:
        feat = feat.astype(w_padded.dtype)   # opt-in bf16 storage path

    # Pad at most 7 rows so every block row-count is a multiple of 8; the
    # ragged last tile (when tm does not divide B8) is handled by the cdiv grid
    # (out-of-bounds stores are dropped), so no full-tile padding copy is made.
    B8 = _round_up(B, 8)
    if B8 != B:
        feat = jnp.pad(feat, ((0, B8 - B), (0, 0)))

    tm = _pick_tile(B8, tile_m)
    num_tiles = pl.cdiv(B8, tm)

    itemsize = feat.dtype.itemsize
    cost = pl.CostEstimate(
        flops=2 * B * IN_FEATURES * NUM_CLASSES,          # useful work only
        transcendentals=0,
        bytes_accessed=(B8 * IN_FEATURES * itemsize       # feat read
                        + IN_FEATURES * N_PAD * itemsize  # weight read
                        + N_PAD * 4                       # bias read
                        + B8 * N_PAD * 4),                # out write
    )

    out_padded = pl.pallas_call(
        _classifier_kernel,
        out_shape=jax.ShapeDtypeStruct((B8, N_PAD), jnp.float32),
        grid_spec=pltpu.PrefetchScalarGridSpec(
            num_scalar_prefetch=0,
            grid=(num_tiles,),
            in_specs=[
                # feat tile: double-buffered (default) for DMA/compute overlap.
                pl.BlockSpec((tm, IN_FEATURES), lambda i: (i, 0)),
                # weight/bias: constant block index -> nothing to prefetch;
                # single-buffer to free VMEM headroom.
                pl.BlockSpec((IN_FEATURES, N_PAD), lambda i: (0, 0),
                             pipeline_mode=pl.Buffered(1)),
                pl.BlockSpec((1, N_PAD), lambda i: (0, 0),
                             pipeline_mode=pl.Buffered(1)),
            ],
            out_specs=pl.BlockSpec((tm, N_PAD), lambda i: (i, 0)),
        ),
        compiler_params=pltpu.CompilerParams(
            dimension_semantics=("parallel",)),   # v7x: batch tiles across both TCs
        cost_estimate=cost,
    )(feat, w_padded, b_padded)

    # Strip batch padding and the lane padding of the output dimension.
    return out_padded[:B, :NUM_CLASSES]


def init_params(key):
    """Deterministic init mirroring nn.Linear(1024, 10) default U[-1/sqrt(in), 1/sqrt(in)]."""
    kw, kb = jax.random.split(key)
    bound = 1.0 / jnp.sqrt(jnp.float32(IN_FEATURES))
    weight = jax.random.uniform(kw, (NUM_CLASSES, IN_FEATURES),
                                dtype=jnp.float32, minval=-bound, maxval=bound)
    bias = jax.random.uniform(kb, (NUM_CLASSES,),
                              dtype=jnp.float32, minval=-bound, maxval=bound)
    return weight, bias


if __name__ == "__main__":
    key = jax.random.PRNGKey(0)
    k_feat, k_params = jax.random.split(key)

    weight, bias = init_params(k_params)
    # Layout conversion hoisted out of the hot path (f32; pass dtype=jnp.bfloat16 to opt in).
    w_padded, b_padded = prepare_params(weight, bias)

    # B=2    : tiny batch (pads 2 -> 8 rows, single tile).
    # B=1095 : pads to 1096 rows, splits into 2 tiles of 552 rows (v7x: one per
    #          TensorCore); last tile is ragged by 8 rows (masked boundary stores).
    for B in (2, 1095):
        feat = jax.random.normal(jax.random.fold_in(k_feat, B),
                                 (B, IN_FEATURES), dtype=jnp.float32)
        out = jax.block_until_ready(
            lenet_classifier_forward(feat, w_padded, b_padded))

        # Plain-JAX reference of the PyTorch forward.
        ref = jnp.maximum(feat, 0.0) @ weight.T + bias
        assert out.shape == (B, NUM_CLASSES)
        assert jnp.allclose(out, ref, atol=1e-4, rtol=1e-4), f"mismatch for B={B}"

    print("KERNEL_OK")
</pallas_src>

<mosaic_0001>
module attributes {stable_mosaic.version = 11 : i64} {
  func.func @_classifier_kernel(%arg0: i32, %arg1: memref<8x1024xf32, #tpu.memory_space<vmem>>, %arg2: memref<1024x128xf32, #tpu.memory_space<vmem>>, %arg3: memref<1x128xf32, #tpu.memory_space<vmem>>, %arg4: memref<8x128xf32, #tpu.memory_space<vmem>>) attributes {dimension_semantics = [#tpu.dimension_semantics<parallel>], iteration_bounds = array<i64: 1>, scalar_prefetch = 0 : i64, scratch_operands = 0 : i64, tpu.core_type = #tpu.core_type<tc>, window_params = [{transform_indices = @transform_0, window_bounds = array<i64: 8, 1024>}, {pipeline_mode = #tpu.pipeline_mode<synchronous>, transform_indices = @transform_1, window_bounds = array<i64: 1024, 128>}, {pipeline_mode = #tpu.pipeline_mode<synchronous>, transform_indices = @transform_2, window_bounds = array<i64: 1, 128>}, {transform_indices = @transform_3, window_bounds = array<i64: 8, 128>}]} {
    %c0 = arith.constant 0 : index
    %c0_0 = arith.constant 0 : index
    %0 = vector.load %arg1[%c0, %c0_0] : memref<8x1024xf32, #tpu.memory_space<vmem>>, vector<8x1024xf32>
    %cst = arith.constant 0.000000e+00 : f32
    %1 = vector.broadcast %cst : f32 to vector<8x1024xf32>
    %2 = arith.maximumf %0, %1 : vector<8x1024xf32>
    %c0_1 = arith.constant 0 : index
    %c0_2 = arith.constant 0 : index
    %3 = vector.load %arg2[%c0_1, %c0_2] : memref<1024x128xf32, #tpu.memory_space<vmem>>, vector<1024x128xf32>
    %cst_3 = arith.constant dense<0.000000e+00> : vector<8x128xf32>
    %4 = tpu.matmul %2, %3, %cst_3 {dimension_numbers = #tpu.dot_dimension_numbers<[1], [0], [0], [1], [0, 0, 1, 1], [], []>} : vector<8x1024xf32>, vector<1024x128xf32>, vector<8x128xf32> -> vector<8x128xf32>
    %c0_4 = arith.constant 0 : index
    %c0_5 = arith.constant 0 : index
    %5 = vector.load %arg3[%c0_4, %c0_5] : memref<1x128xf32, #tpu.memory_space<vmem>>, vector<1x128xf32>
    %6 = vector.broadcast %5 : vector<1x128xf32> to vector<8x128xf32>
    %7 = arith.addf %4, %6 : vector<8x128xf32>
    %c0_6 = arith.constant 0 : index
    %c0_7 = arith.constant 0 : index
    %8 = vector.load %arg4[%c0_6, %c0_7] : memref<8x128xf32, #tpu.memory_space<vmem>>, vector<8x128xf32>
    tpu.vector_store %arg4[%c0_6, %c0_7], %7 {strides = array<i32>} : memref<8x128xf32, #tpu.memory_space<vmem>>, vector<8x128xf32>,
    return
  }
  func.func @transform_0(%arg0: i32) -> (i32, i32) {
    %c0_i32 = arith.constant 0 : i32
    %c0_i32_0 = arith.constant 0 : i32
    return %arg0, %c0_i32 : i32, i32
  }
  func.func @transform_1(%arg0: i32) -> (i32, i32) {
    %c0_i32 = arith.constant 0 : i32
    %c0_i32_0 = arith.constant 0 : i32
    %c0_i32_1 = arith.constant 0 : i32
    return %c0_i32, %c0_i32_0 : i32, i32
  }
  func.func @transform_2(%arg0: i32) -> (i32, i32) {
    %c0_i32 = arith.constant 0 : i32
    %c0_i32_0 = arith.constant 0 : i32
    %c0_i32_1 = arith.constant 0 : i32
    return %c0_i32, %c0_i32_0 : i32, i32
  }
  func.func @transform_3(%arg0: i32) -> (i32, i32) {
    %c0_i32 = arith.constant 0 : i32
    %c0_i32_0 = arith.constant 0 : i32
    return %arg0, %c0_i32 : i32, i32
  }
}

</mosaic_0001>

<llo_original>
// kernel: tpu_custom_call.1
$region0: #{tpu_custom_call.1}
  #allocation0 [shape = 'u32[]', space=smem, size = 0x4, offset = 0x4, fixed_abs, tag = 'smem constant byte address 0x4 - core index']
  #allocation1 [shape = 'u32[144,128]{1,0:T(1,128)}', space=vmem, size = 0x12000, scoped, tag = 'internal scratch']
  %s0 = inlined_call_operand.hbm [shape: f32[8,1024], index: 0, kind: input, shape index: {}]
  %s1 = inlined_call_operand.hbm [shape: f32[1024,128], index: 1, kind: input, shape index: {}]
  %s2 = inlined_call_operand.vmem [shape: f32[1,128], index: 2, kind: input, shape index: {}]
  %s3 = inlined_call_operand.hbm [shape: f32[8,128], index: 3, kind: output, shape index: {}]
  %s4 = sld [smem:[#allocation0]]
  $region30: #{tpu_custom_call.1} parent=0
    _
  %s6 = ssub.s32 1, %s4
  %s7 = scalar_select 0, %s6, %s4
  $region1: #{tpu_custom_call.1} parent=0
    #allocation2 [shape = 'u8[32768]{0}', space=vmem, size = 0x8000, scoped, tag = 'input window, operand 0, single buffered']
    #allocation3 [shape = 's32[1]{0}', space=sflag, size = 0x4, scoped, tag = 'scoped memory for tpu_custom_call.1']
    #allocation4 [shape = 's32[1]{0}', space=sflag, size = 0x4, scoped, tag = 'scoped memory for tpu_custom_call.1']
    #allocation5 [shape = 'u8[524288]{0}', space=vmem, size = 0x80000, scoped, tag = 'input window, operand 1, single buffered']
    #allocation6 [shape = 's32[1]{0}', space=sflag, size = 0x4, scoped, tag = 'scoped memory for tpu_custom_call.1']
    #allocation7 [shape = 'u8[4096]{0}', space=vmem, size = 0x1000, scoped, tag = 'output window, operand 0, single buffered']
    %8 = vsyncpa [#allocation3], 0
    %9 = vsyncpa [#allocation6], 0
    %10 = vsyncpa [#allocation4], 0
    // Predicated region
    $region2: #{tpu_custom_call.1} parent=1 // pred_check
      _
    $region3: #{tpu_custom_call.1} parent=1 // pred_check_branch
      %12 = sbr.rel (0) target = $region5
    $region4: #{tpu_custom_call.1} parent=1 // pred_region
      %s14 = ssub.s32 1024, 1024
      %15 = vsyncadd [#allocation3], %s14
      %s17 = sshll.u32 [#allocation2], 4
      %s18 = int_to_ptr.vmem [resolvable:$true] %s17
      %20 = dma.hbm_to_vmem [thread:$0]  %s0, 1024, %s18, [#allocation3]
    $region5: #{tpu_custom_call.1} parent=1 // pred_fallthru
      _
    // Predicated region
    $region6: #{tpu_custom_call.1} parent=1 // pred_check
      _
    $region7: #{tpu_custom_call.1} parent=1 // pred_check_branch
      %22 = sbr.rel (0) target = $region9
    $region8: #{tpu_custom_call.1} parent=1 // pred_region
      %s24 = ssub.s32 16384, 16384
      %25 = vsyncadd [#allocation6], %s24
      %s26 = sshll.u32 [#allocation5], 4
      %s27 = int_to_ptr.vmem [resolvable:$true] %s26
      %32 = dma.hbm_to_vmem [thread:$0]  %s1, 16384, %s27, [#allocation6], 128, 128, 8
    $region9: #{tpu_custom_call.1} parent=1 // pred_fallthru
      _
    // Predicated region
    $region10: #{tpu_custom_call.1} parent=1 // pred_check
      _
    $region11: #{tpu_custom_call.1} parent=1 // pred_check_branch
      %34 = sbr.rel (0) target = $region13
    $region12: #{tpu_custom_call.1} parent=1 // pred_region
      _
    $region13: #{tpu_custom_call.1} parent=1 // pred_fallthru
      _
    // Predicated region
    $region14: #{tpu_custom_call.1} parent=1 // pred_check
      _
    $region15: #{tpu_custom_call.1} parent=1 // pred_check_branch
      %36 = sbr.rel (0) target = $region17
    $region16: #{tpu_custom_call.1} parent=1 // pred_region
      %37 = dma.done [#allocation3], 1024
    $region17: #{tpu_custom_call.1} parent=1 // pred_fallthru
      _
    // Predicated region
    $region18: #{tpu_custom_call.1} parent=1 // pred_check
      _
    $region19: #{tpu_custom_call.1} parent=1 // pred_check_branch
      %39 = sbr.rel (0) target = $region21
    $region20: #{tpu_custom_call.1} parent=1 // pred_region
      %40 = dma.done [#allocation6], 16384
    $region21: #{tpu_custom_call.1} parent=1 // pred_fallthru
      _
    %v41 = vld [vmem:[#allocation2] sm:$0xff]
    %v42 = vld [vmem:[#allocation2 + $0x8] sm:$0xff]
    %v43 = vld [vmem:[#allocation2 + $0x10] sm:$0xff]
    %v44 = vld [vmem:[#allocation2 + $0x18] sm:$0xff]
    %v45 = vld [vmem:[#allocation2 + $0x20] sm:$0xff]
    %v46 = vld [vmem:[#allocation2 + $0x28] sm:$0xff]
    %v47 = vld [vmem:[#allocation2 + $0x30] sm:$0xff]
    %v48 = vld [vmem:[#allocation2 + $0x38] sm:$0xff]
    %v49 = vmax.f32 %v41, 0.0
    %v50 = vmax.f32 %v42, 0.0
    %v51 = vmax.f32 %v43, 0.0
    %v52 = vmax.f32 %v44, 0.0
    %v53 = vmax.f32 %v45, 0.0
    %v54 = vmax.f32 %v46, 0.0
    %v55 = vmax.f32 %v47, 0.0
    %v56 = vmax.f32 %v48, 0.0
    %v57 = vld [vmem:[#allocation5] sm:$0xff]
    %v58 = vld [vmem:[#allocation5 + $0x8] sm:$0xff]
    %v59 = vld [vmem:[#allocation5 + $0x10] sm:$0xff]
    %v60 = vld [vmem:[#allocation5 + $0x18] sm:$0xff]
    %v61 = vld [vmem:[#allocation5 + $0x20] sm:$0xff]
    %v62 = vld [vmem:[#allocation5 + $0x28] sm:$0xff]
    %v63 = vld [vmem:[#allocation5 + $0x30] sm:$0xff]
    %v64 = vld [vmem:[#allocation5 + $0x38] sm:$0xff]
    %v65 = vld [vmem:[#allocation5 + $0x40] sm:$0xff]
    %v66 = vld [vmem:[#allocation5 + $0x48] sm:$0xff]
    %v67 = vld [vmem:[#allocation5 + $0x50] sm:$0xff]
    %v68 = vld [vmem:[#allocation5 + $0x58] sm:$0xff]
    %v69 = vld [vmem:[#allocation5 + $0x60] sm:$0xff]
    %v70 = vld [vmem:[#allocation5 + $0x68] sm:$0xff]
    %v71 = vld [vmem:[#allocation5 + $0x70] sm:$0xff]
    %v72 = vld [vmem:[#allocation5 + $0x78] sm:$0xff]
    %v73 = vld [vmem:[#allocation5 + $0x80] sm:$0xff]
    %v74 = vld [vmem:[#allocation5 + $0x88] sm:$0xff]
    %v75 = vld [vmem:[#allocation5 + $0x90] sm:$0xff]
    %v76 = vld [vmem:[#allocation5 + $0x98] sm:$0xff]
    %v77 = vld [vmem:[#allocation5 + $0xa0] sm:$0xff]
    %v78 = vld [vmem:[#allocation5 + $0xa8] sm:$0xff]
    %v79 = vld [vmem:[#allocation5 + $0xb0] sm:$0xff]
    %v80 = vld [vmem:[#allocation5 + $0xb8] sm:$0xff]
    %v81 = vld [vmem:[#allocation5 + $0xc0] sm:$0xff]
    %v82 = vld [vmem:[#allocation5 + $0xc8] sm:$0xff]
    %v83 = vld [vmem:[#allocation5 + $0xd0] sm:$0xff]
    %v84 = vld [vmem:[#allocation5 + $0xd8] sm:$0xff]
    %v85 = vld [vmem:[#allocation5 + $0xe0] sm:$0xff]
    %v86 = vld [vmem:[#allocation5 + $0xe8] sm:$0xff]
    %v87 = vld [vmem:[#allocation5 + $0xf0] sm:$0xff]
    %v88 = vld [vmem:[#allocation5 + $0xf8] sm:$0xff]
    %v89 = vld [vmem:[#allocation5 + $0x100] sm:$0xff]
    %v90 = vld [vmem:[#allocation5 + $0x108] sm:$0xff]
    %v91 = vld [vmem:[#allocation5 + $0x110] sm:$0xff]
    %v92 = vld [vmem:[#allocation5 + $0x118] sm:$0xff]
    %v93 = vld [vmem:[#allocation5 + $0x120] sm:$0xff]
    %v94 = vld [vmem:[#allocation5 + $0x128] sm:$0xff]
    %v95 = vld [vmem:[#allocation5 + $0x130] sm:$0xff]
    %v96 = vld [vmem:[#allocation5 + $0x138] sm:$0xff]
    %v97 = vld [vmem:[#allocation5 + $0x140] sm:$0xff]
    %v98 = vld [vmem:[#allocation5 + $0x148] sm:$0xff]
    %v99 = vld [vmem:[#allocation5 + $0x150] sm:$0xff]
    %v100 = vld [vmem:[#allocation5 + $0x158] sm:$0xff]
    %v101 = vld [vmem:[#allocation5 + $0x160] sm:$0xff]
    %v102 = vld [vmem:[#allocation5 + $0x168] sm:$0xff]
    %v103 = vld [vmem:[#allocation5 + $0x170] sm:$0xff]
    %v104 = vld [vmem:[#allocation5 + $0x178] sm:$0xff]
    %v105 = vld [vmem:[#allocation5 + $0x180] sm:$0xff]
    %v106 = vld [vmem:[#allocation5 + $0x188] sm:$0xff]
    %v107 = vld [vmem:[#allocation5 + $0x190] sm:$0xff]
    %v108 = vld [vmem:[#allocation5 + $0x198] sm:$0xff]
    %v109 = vld [vmem:[#allocation5 + $0x1a0] sm:$0xff]
    %v110 = vld [vmem:[#allocation5 + $0x1a8] sm:$0xff]
    %v111 = vld [vmem:[#allocation5 + $0x1b0] sm:$0xff]
    %v112 = vld [vmem:[#allocation5 + $0x1b8] sm:$0xff]
    %v113 = vld [vmem:[#allocation5 + $0x1c0] sm:$0xff]
    %v114 = vld [vmem:[#allocation5 + $0x1c8] sm:$0xff]
    %v115 = vld [vmem:[#allocation5 + $0x1d0] sm:$0xff]
    %v116 = vld [vmem:[#allocation5 + $0x1d8] sm:$0xff]
    %v117 = vld [vmem:[#allocation5 + $0x1e0] sm:$0xff]
    %v118 = vld [vmem:[#allocation5 + $0x1e8] sm:$0xff]
    %v119 = vld [vmem:[#allocation5 + $0x1f0] sm:$0xff]
    %v120 = vld [vmem:[#allocation5 + $0x1f8] sm:$0xff]
    %v121 = vld [vmem:[#allocation5 + $0x200] sm:$0xff]
    %v122 = vld [vmem:[#allocation5 + $0x208] sm:$0xff]
    %v123 = vld [vmem:[#allocation5 + $0x210] sm:$0xff]
    %v124 = vld [vmem:[#allocation5 + $0x218] sm:$0xff]
    %v125 = vld [vmem:[#allocation5 + $0x220] sm:$0xff]
    %v126 = vld [vmem:[#allocation5 + $0x228] sm:$0xff]
    %v127 = vld [vmem:[#allocation5 + $0x230] sm:$0xff]
    %v128 = vld [vmem:[#allocation5 + $0x238] sm:$0xff]
    %v129 = vld [vmem:[#allocation5 + $0x240] sm:$0xff]
    %v130 = vld [vmem:[#allocation5 + $0x248] sm:$0xff]
    %v131 = vld [vmem:[#allocation5 + $0x250] sm:$0xff]
    %v132 = vld [vmem:[#allocation5 + $0x258] sm:$0xff]
    %v133 = vld [vmem:[#allocation5 + $0x260] sm:$0xff]
    %v134 = vld [vmem:[#allocation5 + $0x268] sm:$0xff]
    %v135 = vld [vmem:[#allocation5 + $0x270] sm:$0xff]
    %v136 = vld [vmem:[#allocation5 + $0x278] sm:$0xff]
    %v137 = vld [vmem:[#allocation5 + $0x280] sm:$0xff]
    %v138 = vld [vmem:[#allocation5 + $0x288] sm:$0xff]
    %v139 = vld [vmem:[#allocation5 + $0x290] sm:$0xff]
    %v140 = vld [vmem:[#allocation5 + $0x298] sm:$0xff]
    %v141 = vld [vmem:[#allocation5 + $0x2a0] sm:$0xff]
    %v142 = vld [vmem:[#allocation5 + $0x2a8] sm:$0xff]
    %v143 = vld [vmem:[#allocation5 + $0x2b0] sm:$0xff]
    %v144 = vld [vmem:[#allocation5 + $0x2b8] sm:$0xff]
    %v145 = vld [vmem:[#allocation5 + $0x2c0] sm:$0xff]
    %v146 = vld [vmem:[#allocation5 + $0x2c8] sm:$0xff]
    %v147 = vld [vmem:[#allocation5 + $0x2d0] sm:$0xff]
    %v148 = vld [vmem:[#allocation5 + $0x2d8] sm:$0xff]
    %v149 = vld [vmem:[#allocation5 + $0x2e0] sm:$0xff]
    %v150 = vld [vmem:[#allocation5 + $0x2e8] sm:$0xff]
    %v151 = vld [vmem:[#allocation5 + $0x2f0] sm:$0xff]
    %v152 = vld [vmem:[#allocation5 + $0x2f8] sm:$0xff]
    %v153 = vld [vmem:[#allocation5 + $0x300] sm:$0xff]
    %v154 = vld [vmem:[#allocation5 + $0x308] sm:$0xff]
    %v155 = vld [vmem:[#allocation5 + $0x310] sm:$0xff]
    %v156 = vld [vmem:[#allocation5 + $0x318] sm:$0xff]
    %v157 = vld [vmem:[#allocation5 + $0x320] sm:$0xff]
    %v158 = vld [vmem:[#allocation5 + $0x328] sm:$0xff]
    %v159 = vld [vmem:[#allocation5 + $0x330] sm:$0xff]
    %v160 = vld [vmem:[#allocation5 + $0x338] sm:$0xff]
    %v161 = vld [vmem:[#allocation5 + $0x340] sm:$0xff]
    %v162 = vld [vmem:[#allocation5 + $0x348] sm:$0xff]
    %v163 = vld [vmem:[#allocation5 + $0x350] sm:$0xff]
    %v164 = vld [vmem:[#allocation5 + $0x358] sm:$0xff]
    %v165 = vld [vmem:[#allocation5 + $0x360] sm:$0xff]
    %v166 = vld [vmem:[#allocation5 + $0x368] sm:$0xff]
    %v167 = vld [vmem:[#allocation5 + $0x370] sm:$0xff]
    %v168 = vld [vmem:[#allocation5 + $0x378] sm:$0xff]
    %v169 = vld [vmem:[#allocation5 + $0x380] sm:$0xff]
    %v170 = vld [vmem:[#allocation5 + $0x388] sm:$0xff]
    %v171 = vld [vmem:[#allocation5 + $0x390] sm:$0xff]
    %v172 = vld [vmem:[#allocation5 + $0x398] sm:$0xff]
    %v173 = vld [vmem:[#allocation5 + $0x3a0] sm:$0xff]
    %v174 = vld [vmem:[#allocation5 + $0x3a8] sm:$0xff]
    %v175 = vld [vmem:[#allocation5 + $0x3b0] sm:$0xff]
    %v176 = vld [vmem:[#allocation5 + $0x3b8] sm:$0xff]
    %v177 = vld [vmem:[#allocation5 + $0x3c0] sm:$0xff]
    %v178 = vld [vmem:[#allocation5 + $0x3c8] sm:$0xff]
    %v179 = vld [vmem:[#allocation5 + $0x3d0] sm:$0xff]
    %v180 = vld [vmem:[#allocation5 + $0x3d8] sm:$0xff]
    %v181 = vld [vmem:[#allocation5 + $0x3e0] sm:$0xff]
    %v182 = vld [vmem:[#allocation5 + $0x3e8] sm:$0xff]
    %v183 = vld [vmem:[#allocation5 + $0x3f0] sm:$0xff]
    %v184 = vld [vmem:[#allocation5 + $0x3f8] sm:$0xff]
    %v185 = vld [vmem:[%s2] sm:$0x1]
    %v187 = vlaneseq
    %v188 = vshrl.u32 %v187, 7
    %v189 = vsub.s32 0, %v188
    %v190 = vrot.slane %v185, %v189
    %192 = vmatprep.subr.mxu0 0.0
    %193 = vmatpush1.msra.mxu0 %v57
    %194 = vmatprep.subr.mxu0 0.0
    %195 = vmatpush1.msra.mxu0 %v58
    %196 = vmatprep.subr.mxu0 0.0
    %197 = vmatpush1.msra.mxu0 %v59
    %198 = vmatprep.subr.mxu0 0.0
    %199 = vmatpush1.msra.mxu0 %v60
    %200 = vmatprep.subr.mxu0 0.0
    %201 = vmatpush1.msra.mxu0 %v61
    %202 = vmatprep.subr.mxu0 0.0
    %203 = vmatpush1.msra.mxu0 %v62
    %204 = vmatprep.subr.mxu0 0.0
    %205 = vmatpush1.msra.mxu0 %v63
    %206 = vmatprep.subr.mxu0 0.0
    %207 = vmatpush1.msra.mxu0 %v64
    %208 = vmatprep.subr.mxu0 0.0
    %209 = vmatpush1.msra.mxu0 %v65
    %210 = vmatprep.subr.mxu0 0.0
    %211 = vmatpush1.msra.mxu0 %v66
    %212 = vmatprep.subr.mxu0 0.0
    %213 = vmatpush1.msra.mxu0 %v67
    %214 = vmatprep.subr.mxu0 0.0
    %215 = vmatpush1.msra.mxu0 %v68
    %216 = vmatprep.subr.mxu0 0.0
    %217 = vmatpush1.msra.mxu0 %v69
    %218 = vmatprep.subr.mxu0 0.0
    %219 = vmatpush1.msra.mxu0 %v70
    %220 = vmatprep.subr.mxu0 0.0
    %221 = vmatpush1.msra.mxu0 %v71
    %222 = vmatprep.subr.mxu0 0.0
    %223 = vmatpush1.msra.mxu0 %v72
    %224 = vmatprep.subr.mxu0 0.0
    %225 = vmatpush1.msra.mxu0 %v73
    %226 = vmatprep.subr.mxu0 0.0
    %227 = vmatpush1.msra.mxu0 %v74
    %228 = vmatprep.subr.mxu0 0.0
    %229 = vmatpush1.msra.mxu0 %v75
    %230 = vmatprep.subr.mxu0 0.0
    %231 = vmatpush1.msra.mxu0 %v76
    %232 = vmatprep.subr.mxu0 0.0
    %233 = vmatpush1.msra.mxu0 %v77
    %234 = vmatprep.subr.mxu0 0.0
    %235 = vmatpush1.msra.mxu0 %v78
    %236 = vmatprep.subr.mxu0 0.0
    %237 = vmatpush1.msra.mxu0 %v79
    %238 = vmatprep.subr.mxu0 0.0
    %239 = vmatpush1.msra.mxu0 %v80
    %240 = vmatprep.subr.mxu0 0.0
    %241 = vmatpush1.msra.mxu0 %v81
    %242 = vmatprep.subr.mxu0 0.0
    %243 = vmatpush1.msra.mxu0 %v82
    %244 = vmatprep.subr.mxu0 0.0
    %245 = vmatpush1.msra.mxu0 %v83
    %246 = vmatprep.subr.mxu0 0.0
    %247 = vmatpush1.msra.mxu0 %v84
    %248 = vmatprep.subr.mxu0 0.0
    %249 = vmatpush1.msra.mxu0 %v85
    %250 = vmatprep.subr.mxu0 0.0
    %251 = vmatpush1.msra.mxu0 %v86
    %252 = vmatprep.subr.mxu0 0.0
    %253 = vmatpush1.msra.mxu0 %v87
    %254 = vmatprep.subr.mxu0 0.0
    %255 = vmatpush1.msra.mxu0 %v88
    %256 = vmatprep.mubr.f32.mxu0 %v50
    %257 = vmatmul.mubr.f32.gmra.mrb[0].mxu0 %v49
    %v258 = vpop.f32.mrb[0].mxu0
    %v259 = vadd.f32 %v190, %v258
    %v260 = vpop.f32.mrb[0].mxu0
    %261 = vdwg.mxu0
    %262 = vmatprep.subr.mxu0 0.0
    %263 = vmatpush1.msra.mxu0 %v89
    %264 = vmatprep.subr.mxu0 0.0
    %265 = vmatpush1.msra.mxu0 %v90
    %266 = vmatprep.subr.mxu0 0.0
    %267 = vmatpush1.msra.mxu0 %v91
    %268 = vmatprep.subr.mxu0 0.0
    %269 = vmatpush1.msra.mxu0 %v92
    %270 = vmatprep.subr.mxu0 0.0
    %271 = vmatpush1.msra.mxu0 %v93
    %272 = vmatprep.subr.mxu0 0.0
    %273 = vmatpush1.msra.mxu0 %v94
    %274 = vmatprep.subr.mxu0 0.0
    %275 = vmatpush1.msra.mxu0 %v95
    %276 = vmatprep.subr.mxu0 0.0
    %277 = vmatpush1.msra.mxu0 %v96
    %278 = vmatprep.subr.mxu0 0.0
    %279 = vmatpush1.msra.mxu0 %v97
    %280 = vmatprep.subr.mxu0 0.0
    %281 = vmatpush1.msra.mxu0 %v98
    %282 = vmatprep.subr.mxu0 0.0
    %283 = vmatpush1.msra.mxu0 %v99
    %284 = vmatprep.subr.mxu0 0.0
    %285 = vmatpush1.msra.mxu0 %v100
    %286 = vmatprep.subr.mxu0 0.0
    %287 = vmatpush1.msra.mxu0 %v101
    %288 = vmatprep.subr.mxu0 0.0
    %289 = vmatpush1.msra.mxu0 %v102
    %290 = vmatprep.subr.mxu0 0.0
    %291 = vmatpush1.msra.mxu0 %v103
    %292 = vmatprep.subr.mxu0 0.0
    %293 = vmatpush1.msra.mxu0 %v104
    %294 = vmatprep.subr.mxu0 0.0
    %295 = vmatpush1.msra.mxu0 %v105
    %296 = vmatprep.subr.mxu0 0.0
    %297 = vmatpush1.msra.mxu0 %v106
    %298 = vmatprep.subr.mxu0 0.0
    %299 = vmatpush1.msra.mxu0 %v107
    %300 = vmatprep.subr.mxu0 0.0
    %301 = vmatpush1.msra.mxu0 %v108
    %302 = vmatprep.subr.mxu0 0.0
    %303 = vmatpush1.msra.mxu0 %v109
    %304 = vmatprep.subr.mxu0 0.0
    %305 = vmatpush1.msra.mxu0 %v110
    %306 = vmatprep.subr.mxu0 0.0
    %307 = vmatpush1.msra.mxu0 %v111
    %308 = vmatprep.subr.mxu0 0.0
    %309 = vmatpush1.msra.mxu0 %v112
    %310 = vmatprep.subr.mxu0 0.0
    %311 = vmatpush1.msra.mxu0 %v113
    %312 = vmatprep.subr.mxu0 0.0
    %313 = vmatpush1.msra.mxu0 %v114
    %314 = vmatprep.subr.mxu0 0.0
    %315 = vmatpush1.msra.mxu0 %v115
    %316 = vmatprep.subr.mxu0 0.0
    %317 = vmatpush1.msra.mxu0 %v116
    %318 = vmatprep.subr.mxu0 0.0
    %319 = vmatpush1.msra.mxu0 %v117
    %320 = vmatprep.subr.mxu0 0.0
    %321 = vmatpush1.msra.mxu0 %v118
    %322 = vmatprep.subr.mxu0 0.0
    %323 = vmatpush1.msra.mxu0 %v119
    %324 = vmatprep.subr.mxu0 0.0
    %325 = vmatpush1.msra.mxu0 %v120
    %326 = vmatprep.mubr.f32.mxu0 %v52
    %327 = vmatmul.mubr.f32.gmra.mrb[0].mxu0 %v51
    %v328 = vpop.f32.mrb[0].mxu0
    %v329 = vadd.f32 %v259, %v328
    %v330 = vpop.f32.mrb[0].mxu0
    %331 = vdwg.mxu0
    %332 = vmatprep.subr.mxu0 0.0
    %333 = vmatpush1.msra.mxu0 %v121
    %334 = vmatprep.subr.mxu0 0.0
    %335 = vmatpush1.msra.mxu0 %v122
    %336 = vmatprep.subr.mxu0 0.0
    %337 = vmatpush1.msra.mxu0 %v123
    %338 = vmatprep.subr.mxu0 0.0
    %339 = vmatpush1.msra.mxu0 %v124
    %340 = vmatprep.subr.mxu0 0.0
    %341 = vmatpush1.msra.mxu0 %v125
    %342 = vmatprep.subr.mxu0 0.0
    %343 = vmatpush1.msra.mxu0 %v126
    %344 = vmatprep.subr.mxu0 0.0
    %345 = vmatpush1.msra.mxu0 %v127
    %346 = vmatprep.subr.mxu0 0.0
    %347 = vmatpush1.msra.mxu0 %v128
    %348 = vmatprep.subr.mxu0 0.0
    %349 = vmatpush1.msra.mxu0 %v129
    %350 = vmatprep.subr.mxu0 0.0
    %351 = vmatpush1.msra.mxu0 %v130
    %352 = vmatprep.subr.mxu0 0.0
    %353 = vmatpush1.msra.mxu0 %v131
    %354 = vmatprep.subr.mxu0 0.0
    %355 = vmatpush1.msra.mxu0 %v132
    %356 = vmatprep.subr.mxu0 0.0
    %357 = vmatpush1.msra.mxu0 %v133
    %358 = vmatprep.subr.mxu0 0.0
    %359 = vmatpush1.msra.mxu0 %v134
    %360 = vmatprep.subr.mxu0 0.0
    %361 = vmatpush1.msra.mxu0 %v135
    %362 = vmatprep.subr.mxu0 0.0
    %363 = vmatpush1.msra.mxu0 %v136
    %364 = vmatprep.subr.mxu0 0.0
    %365 = vmatpush1.msra.mxu0 %v137
    %366 = vmatprep.subr.mxu0 0.0
    %367 = vmatpush1.msra.mxu0 %v138
    %368 = vmatprep.subr.mxu0 0.0
    %369 = vmatpush1.msra.mxu0 %v139
    %370 = vmatprep.subr.mxu0 0.0
    %371 = vmatpush1.msra.mxu0 %v140
    %372 = vmatprep.subr.mxu0 0.0
    %373 = vmatpush1.msra.mxu0 %v141
    %374 = vmatprep.subr.mxu0 0.0
    %375 = vmatpush1.msra.mxu0 %v142
    %376 = vmatprep.subr.mxu0 0.0
    %377 = vmatpush1.msra.mxu0 %v143
    %378 = vmatprep.subr.mxu0 0.0
    %379 = vmatpush1.msra.mxu0 %v144
    %380 = vmatprep.subr.mxu0 0.0
    %381 = vmatpush1.msra.mxu0 %v145
    %382 = vmatprep.subr.mxu0 0.0
    %383 = vmatpush1.msra.mxu0 %v146
    %384 = vmatprep.subr.mxu0 0.0
    %385 = vmatpush1.msra.mxu0 %v147
    %386 = vmatprep.subr.mxu0 0.0
    %387 = vmatpush1.msra.mxu0 %v148
    %388 = vmatprep.subr.mxu0 0.0
    %389 = vmatpush1.msra.mxu0 %v149
    %390 = vmatprep.subr.mxu0 0.0
    %391 = vmatpush1.msra.mxu0 %v150
    %392 = vmatprep.subr.mxu0 0.0
    %393 = vmatpush1.msra.mxu0 %v151
    %394 = vmatprep.subr.mxu0 0.0
    %395 = vmatpush1.msra.mxu0 %v152
    %396 = vmatprep.mubr.f32.mxu0 %v54
    %397 = vmatmul.mubr.f32.gmra.mrb[0].mxu0 %v53
    %v398 = vpop.f32.mrb[0].mxu0
    %v399 = vadd.f32 %v329, %v398
    %v400 = vpop.f32.mrb[0].mxu0
    %401 = vdwg.mxu0
    %402 = vmatprep.subr.mxu0 0.0
    %403 = vmatpush1.msra.mxu0 %v153
    %404 = vmatprep.subr.mxu0 0.0
    %405 = vmatpush1.msra.mxu0 %v154
    %406 = vmatprep.subr.mxu0 0.0
    %407 = vmatpush1.msra.mxu0 %v155
    %408 = vmatprep.subr.mxu0 0.0
    %409 = vmatpush1.msra.mxu0 %v156
    %410 = vmatprep.subr.mxu0 0.0
    %411 = vmatpush1.msra.mxu0 %v157
    %412 = vmatprep.subr.mxu0 0.0
    %413 = vmatpush1.msra.mxu0 %v158
    %414 = vmatprep.subr.mxu0 0.0
    %415 = vmatpush1.msra.mxu0 %v159
    %416 = vmatprep.subr.mxu0 0.0
    %417 = vmatpush1.msra.mxu0 %v160
    %418 = vmatprep.subr.mxu0 0.0
    %419 = vmatpush1.msra.mxu0 %v161
    %420 = vmatprep.subr.mxu0 0.0
    %421 = vmatpush1.msra.mxu0 %v162
    %422 = vmatprep.subr.mxu0 0.0
    %423 = vmatpush1.msra.mxu0 %v163
    %424 = vmatprep.subr.mxu0 0.0
    %425 = vmatpush1.msra.mxu0 %v164
    %426 = vmatprep.subr.mxu0 0.0
    %427 = vmatpush1.msra.mxu0 %v165
    %428 = vmatprep.subr.mxu0 0.0
    %429 = vmatpush1.msra.mxu0 %v166
    %430 = vmatprep.subr.mxu0 0.0
    %431 = vmatpush1.msra.mxu0 %v167
    %432 = vmatprep.subr.mxu0 0.0
    %433 = vmatpush1.msra.mxu0 %v168
    %434 = vmatprep.subr.mxu0 0.0
    %435 = vmatpush1.msra.mxu0 %v169
    %436 = vmatprep.subr.mxu0 0.0
    %437 = vmatpush1.msra.mxu0 %v170
    %438 = vmatprep.subr.mxu0 0.0
    %439 = vmatpush1.msra.mxu0 %v171
    %440 = vmatprep.subr.mxu0 0.0
    %441 = vmatpush1.msra.mxu0 %v172
    %442 = vmatprep.subr.mxu0 0.0
    %443 = vmatpush1.msra.mxu0 %v173
    %444 = vmatprep.subr.mxu0 0.0
    %445 = vmatpush1.msra.mxu0 %v174
    %446 = vmatprep.subr.mxu0 0.0
    %447 = vmatpush1.msra.mxu0 %v175
    %448 = vmatprep.subr.mxu0 0.0
    %449 = vmatpush1.msra.mxu0 %v176
    %450 = vmatprep.subr.mxu0 0.0
    %451 = vmatpush1.msra.mxu0 %v177
    %452 = vmatprep.subr.mxu0 0.0
    %453 = vmatpush1.msra.mxu0 %v178
    %454 = vmatprep.subr.mxu0 0.0
    %455 = vmatpush1.msra.mxu0 %v179
    %456 = vmatprep.subr.mxu0 0.0
    %457 = vmatpush1.msra.mxu0 %v180
    %458 = vmatprep.subr.mxu0 0.0
    %459 = vmatpush1.msra.mxu0 %v181
    %460 = vmatprep.subr.mxu0 0.0
    %461 = vmatpush1.msra.mxu0 %v182
    %462 = vmatprep.subr.mxu0 0.0
    %463 = vmatpush1.msra.mxu0 %v183
    %464 = vmatprep.subr.mxu0 0.0
    %465 = vmatpush1.msra.mxu0 %v184
    %466 = vmatprep.mubr.f32.mxu0 %v56
    %467 = vmatmul.mubr.f32.gmra.mrb[0].mxu0 %v55
    %v468 = vpop.f32.mrb[0].mxu0
    %v469 = vadd.f32 %v399, %v468
    %v470 = vpop.f32.mrb[0].mxu0
    %471 = vdwg.mxu0
    %472 = vst [vmem:[#allocation7] sm:$0xff] %v469
    // Predicated region
    $region22: #{tpu_custom_call.1} parent=1 // pred_check
      _
    $region23: #{tpu_custom_call.1} parent=1 // pred_check_branch
      %474 = sbr.rel (0) target = $region25
    $region24: #{tpu_custom_call.1} parent=1 // pred_region
      %s476 = ssub.s32 128, 128
      %477 = vsyncadd [#allocation4], %s476
      %s479 = sshll.u32 [#allocation7], 4
      %s480 = int_to_ptr.vmem [resolvable:$true] %s479
      %482 = dma.vmem_to_hbm [thread:$0]  %s480, 128, %s3, [#allocation4]
    $region25: #{tpu_custom_call.1} parent=1 // pred_fallthru
      _
    // Predicated region
    $region26: #{tpu_custom_call.1} parent=1 // pred_check
      _
    $region27: #{tpu_custom_call.1} parent=1 // pred_check_branch
      %484 = sbr.rel (0) target = $region29
    $region28: #{tpu_custom_call.1} parent=1 // pred_region
      %485 = dma.done [#allocation4], 128
    $region29: #{tpu_custom_call.1} parent=1 // pred_fallthru
      _
    %486 = vsyncpa [#allocation3], 1
    %487 = vsyncpa [#allocation6], 1
    %488 = vsyncpa [#allocation4], 1

</llo_original>
